<compile_context>
chip_gen: v6e
topology: v6e:2x2x1
jax: 0.10.0
libtpu: 0.0.40
codegen_flags: <defaults>
</compile_context>

<pallas_src>
import functools

import jax
import jax.numpy as jnp
import numpy as np
from jax.experimental import pallas as pl
from jax.experimental.pallas import tpu as pltpu

_LN_EPS = 1e-5


def _output_block_kernel(xc_ref, wp_ref, bp_ref, wq_ref, bq_ref,
                         g_ref, beta_ref, w1_ref, b1_ref,
                         w23_ref, bh_ref, o_ref, *, act_func, bb, n_vertex):
    """Fused OutputBlock forward for a block of `bb` batch samples.

    xc_ref  : (1, bb*N, K)  im2col'ed input patches (K = c_in*Ko, T' == 1)
    wp_ref  : (K, c0)       conv "p" half weights (Align residual folded in); bp_ref (1, c0)
    wq_ref  : (K, c0)       conv gate half weights;                            bq_ref (1, c0)
    g_ref   : (N, c0)       LayerNorm gamma;  beta_ref (N, c0) LayerNorm beta
    w1_ref  : (c0, c1)      fc1 weight (transposed);  b1_ref (1, c1)
    w23_ref : (N, c1)       fused fc2/fc3 weight  W23[n,c] = w3[n] * w2[c]
    bh_ref  : (1, 1)        fused head bias  b3 + b2 * sum(w3)
    o_ref   : (bb, 1, 1)    sigmoid(head) per sample
    """
    N = n_vertex
    xc = xc_ref[0]                                          # (bb*N, K)

    # ---- TemporalConvLayer: causal conv as im2col matmuls + GLU / GTU ----
    x_p = jnp.dot(xc, wp_ref[...], preferred_element_type=jnp.float32) + bp_ref[...]
    x_q = jnp.dot(xc, wq_ref[...], preferred_element_type=jnp.float32) + bq_ref[...]
    gate = jax.nn.sigmoid(x_q)
    if act_func == 'glu':
        act = x_p * gate                                    # residual already inside wp
    else:  # 'gtu'
        act = jnp.tanh(x_p) * gate

    # ---- per-sample LayerNorm over each (N, c0) slab ----
    c0 = act.shape[-1]
    act3 = act.reshape(bb, N, c0)
    inv = 1.0 / float(N * c0)
    mean = jnp.sum(jnp.sum(act3, axis=2, keepdims=True), axis=1, keepdims=True) * inv
    cen = act3 - mean
    var = jnp.sum(jnp.sum(cen * cen, axis=2, keepdims=True), axis=1, keepdims=True) * inv
    ln3 = cen * jax.lax.rsqrt(var + _LN_EPS) * g_ref[...][None] + beta_ref[...][None]

    # ---- fc1 + ReLU (Dropout is identity in eval mode) ----
    y1 = jnp.dot(ln3.reshape(bb * N, c0), w1_ref[...],
                 preferred_element_type=jnp.float32) + b1_ref[...]
    y1 = jnp.maximum(y1, 0.0)                               # (bb*N, c1)

    # ---- fused fc2 / fc3 head:  z_s = sum_{n,c} y1[s,n,c] * w3[n]*w2[c] + b' ----
    c1 = y1.shape[-1]
    prod = y1.reshape(bb, N, c1) * w23_ref[...][None]
    z = jnp.sum(jnp.sum(prod, axis=2, keepdims=True), axis=1, keepdims=True)  # (bb,1,1)
    o_ref[...] = jax.nn.sigmoid(z + bh_ref[...]).astype(o_ref.dtype)


def output_block_forward(x, params, *, Ko, act_func='glu', block_b=None):
    """OutputBlock.forward (eval mode).  x: (B, c_in, T, N) float32 -> (B, 1)."""
    B, c_in, T, N = x.shape
    w_conv = params['w_conv']          # (2*c0, c_in, Ko, 1)
    b_conv = params['b_conv']          # (2*c0,)
    gamma, beta = params['ln_gamma'], params['ln_beta']    # (N, c0)
    w1, b1 = params['w1'], params['b1']                    # (c1, c0), (c1,)
    w2, b2 = params['w2'], params['b2']                    # (end_ch, c1), (end_ch,)
    w3, b3 = params['w3'], params['b3']                    # (1, N), (1,)

    two_c0 = w_conv.shape[0]
    c0 = two_c0 // 2
    c1 = w1.shape[0]
    end_ch = w2.shape[0]
    Tp = T - Ko + 1
    K = c_in * Ko

    assert act_func in ('glu', 'gtu'), \
        "TODO(synk): relu/silu TemporalConvLayer variants not implemented"
    # The PyTorch `view(len(x), -1)` -> fc3(in_features=n_vertex) only works when:
    assert end_ch == 1 and Tp == 1, "fc3(in=n_vertex) requires end_channel == 1 and Ko == T"
    if c_in > c0:
        # TODO(synk): Align 1x1-conv branch (c_in > channels[0]) not implemented.
        raise NotImplementedError("Align conv branch (c_in > c_out) not implemented")

    # ---- batch-block size: amortize per-grid-step overhead -------------------
    if block_b is None:
        bb = max(1, min(B, -(-256 // N)))       # target bb*N >= 256 when B allows
    else:
        bb = max(1, min(B, int(block_b)))
    if N % 8 != 0:
        bb = 1                                  # keep in-kernel (bb,N,*) reshapes layout-legal
    num_blocks = -(-B // bb)
    B_pad = num_blocks * bb

    # ---- layout plumbing (wrapper-side glue, runs in XLA) --------------------
    # im2col for the (Ko,1) VALID conv with T' == 1: rows = (sample, vertex).
    xc = jnp.transpose(x, (0, 3, 1, 2)).reshape(B, N, K)                  # (B, N, K)
    if B_pad != B:
        xc = jnp.concatenate([xc, jnp.zeros((B_pad - B, N, K), xc.dtype)], axis=0)
    xc = xc.reshape(num_blocks, bb * N, K)

    # conv weight (2*c0, c_in, Ko, 1) -> (K, 2*c0), split GLU halves, and fold
    # the Align identity residual (input channel c at t = Ko-1 -> output chan c).
    w_flat = jnp.transpose(w_conv[..., 0].reshape(two_c0, K))             # (K, 2*c0)
    wp, wq = w_flat[:, :c0], w_flat[:, c0:]
    wp = wp.at[jnp.arange(c_in) * Ko + (Ko - 1), jnp.arange(c_in)].add(1.0)
    bp = b_conv[:c0].reshape(1, c0)
    bq = b_conv[c0:].reshape(1, c0)

    w1t = jnp.transpose(w1)                                               # (c0, c1)
    b1r = b1.reshape(1, c1)
    # fused scalar head: fc2 (c1 -> 1) composed with fc3 (N -> 1)
    w23 = jnp.transpose(w3).reshape(N, 1) * w2.reshape(1, c1)             # (N, c1)
    bh = (b3[0] + b2[0] * jnp.sum(w3)).reshape(1, 1)                      # (1, 1)

    kernel = functools.partial(_output_block_kernel,
                               act_func=act_func, bb=bb, n_vertex=N)
    resident = lambda g: (0, 0)        # weights stay VMEM-resident across the grid

    out = pl.pallas_call(
        kernel,
        out_shape=jax.ShapeDtypeStruct((B_pad, 1, 1), x.dtype),
        grid=(num_blocks,),
        in_specs=[
            pl.BlockSpec((1, bb * N, K), lambda g: (g, 0, 0)),   # streamed im2col slab
            pl.BlockSpec((K, c0), resident),                     # wp (+ folded residual)
            pl.BlockSpec((1, c0), resident),                     # bp
            pl.BlockSpec((K, c0), resident),                     # wq
            pl.BlockSpec((1, c0), resident),                     # bq
            pl.BlockSpec((N, c0), resident),                     # ln gamma
            pl.BlockSpec((N, c0), resident),                     # ln beta
            pl.BlockSpec((c0, c1), resident),                    # fc1 weight^T
            pl.BlockSpec((1, c1), resident),                     # fc1 bias
            pl.BlockSpec((N, c1), resident),                     # fused fc2/fc3 weight
            pl.BlockSpec((1, 1), resident),                      # fused head bias
        ],
        out_specs=pl.BlockSpec((bb, 1, 1), lambda g: (g, 0, 0)),
        compiler_params=pltpu.CompilerParams(dimension_semantics=("parallel",)),
    )(xc, wp, bp, wq, bq, gamma, beta, w1t, b1r, w23, bh)

    return out.reshape(B_pad, 1)[:B]


def _reference(x, params, *, Ko, act_func='glu'):
    """Pure-JAX reproduction of the PyTorch OutputBlock forward (eval mode)."""
    B, c_in, T, N = x.shape
    w_conv, b_conv = params['w_conv'], params['b_conv']
    c0 = w_conv.shape[0] // 2
    x_al = x
    if c_in < c0:
        x_al = jnp.concatenate([x, jnp.zeros((B, c0 - c_in, T, N), x.dtype)], axis=1)
    x_in = x_al[:, :, Ko - 1:, :]                                         # (B, c0, T', N)
    conv = jax.lax.conv_general_dilated(
        x, w_conv, window_strides=(1, 1), padding='VALID',
        dimension_numbers=('NCHW', 'OIHW', 'NCHW')) + b_conv[None, :, None, None]
    x_p, x_q = conv[:, :c0], conv[:, c0:]
    if act_func == 'glu':
        t = (x_p + x_in) * jax.nn.sigmoid(x_q)
    else:
        t = jnp.tanh(x_p + x_in) * jax.nn.sigmoid(x_q)
    xp = jnp.transpose(t, (0, 2, 3, 1))                                   # (B, T', N, c0)
    mean = jnp.mean(xp, axis=(-2, -1), keepdims=True)
    var = jnp.mean((xp - mean) ** 2, axis=(-2, -1), keepdims=True)
    ln = (xp - mean) / jnp.sqrt(var + _LN_EPS) * params['ln_gamma'] + params['ln_beta']
    y1 = jax.nn.relu(ln @ params['w1'].T + params['b1'])
    y2 = y1 @ params['w2'].T + params['b2']                               # (B, T', N, 1)
    y2 = jnp.transpose(y2, (0, 3, 1, 2)).reshape(B, -1)                   # (B, T'*N)
    return jax.nn.sigmoid(y2 @ params['w3'].T + params['b3'])             # (B, 1)


if __name__ == "__main__":
    B, c_in, T, N = 2, 4, 8, 16       # batch, last_block_channel, timesteps, n_vertex
    Ko = T                            # output block consumes all remaining timesteps
    c0, c1, end_ch = 32, 16, 1        # channels=[32, 16], end_channel=1

    key = jax.random.PRNGKey(0)
    ks = jax.random.split(key, 11)

    def u(k, shape, bound):
        return jax.random.uniform(k, shape, jnp.float32, minval=-bound, maxval=bound)

    x = jax.random.normal(ks[0], (B, c_in, T, N), dtype=jnp.float32)

    conv_bound = 1.0 / (c_in * Ko) ** 0.5
    params = {
        'w_conv': u(ks[1], (2 * c0, c_in, Ko, 1), conv_bound),
        'b_conv': u(ks[2], (2 * c0,), conv_bound),
        'ln_gamma': 1.0 + 0.1 * jax.random.normal(ks[3], (N, c0), dtype=jnp.float32),
        'ln_beta': 0.1 * jax.random.normal(ks[4], (N, c0), dtype=jnp.float32),
        'w1': u(ks[5], (c1, c0), 1.0 / c0 ** 0.5),
        'b1': u(ks[6], (c1,), 1.0 / c0 ** 0.5),
        'w2': u(ks[7], (end_ch, c1), 1.0 / c1 ** 0.5),
        'b2': u(ks[8], (end_ch,), 1.0 / c1 ** 0.5),
        'w3': u(ks[9], (1, N), 1.0 / N ** 0.5),
        'b3': u(ks[10], (1,), 1.0 / N ** 0.5),
    }

    out = jax.block_until_ready(output_block_forward(x, params, Ko=Ko, act_func='glu'))
    ref = jax.block_until_ready(_reference(x, params, Ko=Ko, act_func='glu'))
    np.testing.assert_allclose(np.asarray(out), np.asarray(ref), rtol=1e-4, atol=1e-5)
    print("KERNEL_OK")
</pallas_src>

<mosaic_0001>
module attributes {stable_mosaic.version = 11 : i64} {
  func.func @_output_block_kernel(%arg0: i32, %arg1: memref<1x32x32xf32, #tpu.memory_space<vmem>>, %arg2: memref<32x32xf32, #tpu.memory_space<vmem>>, %arg3: memref<1x32xf32, #tpu.memory_space<vmem>>, %arg4: memref<32x32xf32, #tpu.memory_space<vmem>>, %arg5: memref<1x32xf32, #tpu.memory_space<vmem>>, %arg6: memref<16x32xf32, #tpu.memory_space<vmem>>, %arg7: memref<16x32xf32, #tpu.memory_space<vmem>>, %arg8: memref<32x16xf32, #tpu.memory_space<vmem>>, %arg9: memref<1x16xf32, #tpu.memory_space<vmem>>, %arg10: memref<16x16xf32, #tpu.memory_space<vmem>>, %arg11: memref<1x1xf32, #tpu.memory_space<vmem>>, %arg12: memref<2x1x1xf32, #tpu.memory_space<vmem>>) attributes {dimension_semantics = [#tpu.dimension_semantics<parallel>], iteration_bounds = array<i64: 1>, scalar_prefetch = 0 : i64, scratch_operands = 0 : i64, tpu.core_type = #tpu.core_type<tc>, window_params = [{transform_indices = @transform_0, window_bounds = array<i64: 1, 32, 32>}, {pipeline_mode = #tpu.pipeline_mode<synchronous>, transform_indices = @transform_1, window_bounds = array<i64: 32, 32>}, {pipeline_mode = #tpu.pipeline_mode<synchronous>, transform_indices = @transform_2, window_bounds = array<i64: 1, 32>}, {pipeline_mode = #tpu.pipeline_mode<synchronous>, transform_indices = @transform_3, window_bounds = array<i64: 32, 32>}, {pipeline_mode = #tpu.pipeline_mode<synchronous>, transform_indices = @transform_4, window_bounds = array<i64: 1, 32>}, {pipeline_mode = #tpu.pipeline_mode<synchronous>, transform_indices = @transform_5, window_bounds = array<i64: 16, 32>}, {pipeline_mode = #tpu.pipeline_mode<synchronous>, transform_indices = @transform_6, window_bounds = array<i64: 16, 32>}, {pipeline_mode = #tpu.pipeline_mode<synchronous>, transform_indices = @transform_7, window_bounds = array<i64: 32, 16>}, {pipeline_mode = #tpu.pipeline_mode<synchronous>, transform_indices = @transform_8, window_bounds = array<i64: 1, 16>}, {pipeline_mode = #tpu.pipeline_mode<synchronous>, transform_indices = @transform_9, window_bounds = array<i64: 16, 16>}, {pipeline_mode = #tpu.pipeline_mode<synchronous>, transform_indices = @transform_10, window_bounds = array<i64: 1, 1>}, {transform_indices = @transform_11, window_bounds = array<i64: 2, 1, 1>}]} {
    %c0 = arith.constant 0 : index
    %c0_0 = arith.constant 0 : index
    %c0_1 = arith.constant 0 : index
    %0 = vector.load %arg1[%c0, %c0_0, %c0_1] : memref<1x32x32xf32, #tpu.memory_space<vmem>>, vector<1x32x32xf32>
    %1 = vector.shape_cast %0 : vector<1x32x32xf32> to vector<32x32xf32>
    %c0_2 = arith.constant 0 : index
    %c0_3 = arith.constant 0 : index
    %2 = vector.load %arg2[%c0_2, %c0_3] : memref<32x32xf32, #tpu.memory_space<vmem>>, vector<32x32xf32>
    %cst = arith.constant dense<0.000000e+00> : vector<32x32xf32>
    %3 = tpu.matmul %1, %2, %cst {dimension_numbers = #tpu.dot_dimension_numbers<[1], [0], [0], [1], [0, 0, 1, 1], [], []>} : vector<32x32xf32>, vector<32x32xf32>, vector<32x32xf32> -> vector<32x32xf32>
    %c0_4 = arith.constant 0 : index
    %c0_5 = arith.constant 0 : index
    %4 = vector.load %arg3[%c0_4, %c0_5] : memref<1x32xf32, #tpu.memory_space<vmem>>, vector<1x32xf32>
    %5 = vector.broadcast %4 : vector<1x32xf32> to vector<32x32xf32>
    %6 = arith.addf %3, %5 : vector<32x32xf32>
    %c0_6 = arith.constant 0 : index
    %c0_7 = arith.constant 0 : index
    %7 = vector.load %arg4[%c0_6, %c0_7] : memref<32x32xf32, #tpu.memory_space<vmem>>, vector<32x32xf32>
    %cst_8 = arith.constant dense<0.000000e+00> : vector<32x32xf32>
    %8 = tpu.matmul %1, %7, %cst_8 {dimension_numbers = #tpu.dot_dimension_numbers<[1], [0], [0], [1], [0, 0, 1, 1], [], []>} : vector<32x32xf32>, vector<32x32xf32>, vector<32x32xf32> -> vector<32x32xf32>
    %c0_9 = arith.constant 0 : index
    %c0_10 = arith.constant 0 : index
    %9 = vector.load %arg5[%c0_9, %c0_10] : memref<1x32xf32, #tpu.memory_space<vmem>>, vector<1x32xf32>
    %10 = vector.broadcast %9 : vector<1x32xf32> to vector<32x32xf32>
    %11 = arith.addf %8, %10 : vector<32x32xf32>
    %12 = arith.negf %11 : vector<32x32xf32>
    %13 = math.exp %12 : vector<32x32xf32>
    %cst_11 = arith.constant 1.000000e+00 : f32
    %14 = vector.broadcast %cst_11 : f32 to vector<32x32xf32>
    %15 = arith.addf %14, %13 : vector<32x32xf32>
    %16 = arith.divf %14, %15 : vector<32x32xf32>
    %17 = arith.mulf %6, %16 : vector<32x32xf32>
    %18 = vector.shape_cast %17 : vector<32x32xf32> to vector<2x16x32xf32>
    %cst_12 = arith.constant dense<0.000000e+00> : vector<2x16xf32>
    %19 = vector.multi_reduction <add>, %18, %cst_12 [2] : vector<2x16x32xf32> to vector<2x16xf32>
    %20 = vector.shape_cast %19 : vector<2x16xf32> to vector<2x16x1xf32>
    %cst_13 = arith.constant dense<0.000000e+00> : vector<2x1xf32>
    %21 = vector.multi_reduction <add>, %20, %cst_13 [1] : vector<2x16x1xf32> to vector<2x1xf32>
    %22 = vector.shape_cast %21 : vector<2x1xf32> to vector<2x1x1xf32>
    %cst_14 = arith.constant 0.001953125 : f32
    %23 = vector.broadcast %cst_14 : f32 to vector<2x1x1xf32>
    %24 = arith.mulf %22, %23 : vector<2x1x1xf32>
    %25 = vector.broadcast %24 : vector<2x1x1xf32> to vector<2x16x32xf32>
    %26 = arith.subf %18, %25 : vector<2x16x32xf32>
    %27 = arith.mulf %26, %26 : vector<2x16x32xf32>
    %cst_15 = arith.constant dense<0.000000e+00> : vector<2x16xf32>
    %28 = vector.multi_reduction <add>, %27, %cst_15 [2] : vector<2x16x32xf32> to vector<2x16xf32>
    %29 = vector.shape_cast %28 : vector<2x16xf32> to vector<2x16x1xf32>
    %cst_16 = arith.constant dense<0.000000e+00> : vector<2x1xf32>
    %30 = vector.multi_reduction <add>, %29, %cst_16 [1] : vector<2x16x1xf32> to vector<2x1xf32>
    %31 = vector.shape_cast %30 : vector<2x1xf32> to vector<2x1x1xf32>
    %cst_17 = arith.constant 0.001953125 : f32
    %32 = vector.broadcast %cst_17 : f32 to vector<2x1x1xf32>
    %33 = arith.mulf %31, %32 : vector<2x1x1xf32>
    %cst_18 = arith.constant 9.99999974E-6 : f32
    %34 = vector.broadcast %cst_18 : f32 to vector<2x1x1xf32>
    %35 = arith.addf %33, %34 : vector<2x1x1xf32>
    %36 = math.rsqrt %35 : vector<2x1x1xf32>
    %37 = vector.broadcast %36 : vector<2x1x1xf32> to vector<2x16x32xf32>
    %38 = arith.mulf %26, %37 : vector<2x16x32xf32>
    %c0_19 = arith.constant 0 : index
    %c0_20 = arith.constant 0 : index
    %39 = vector.load %arg6[%c0_19, %c0_20] : memref<16x32xf32, #tpu.memory_space<vmem>>, vector<16x32xf32>
    %40 = vector.shape_cast %39 : vector<16x32xf32> to vector<1x16x32xf32>
    %41 = vector.broadcast %40 : vector<1x16x32xf32> to vector<2x16x32xf32>
    %42 = arith.mulf %38, %41 : vector<2x16x32xf32>
    %c0_21 = arith.constant 0 : index
    %c0_22 = arith.constant 0 : index
    %43 = vector.load %arg7[%c0_21, %c0_22] : memref<16x32xf32, #tpu.memory_space<vmem>>, vector<16x32xf32>
    %44 = vector.shape_cast %43 : vector<16x32xf32> to vector<1x16x32xf32>
    %45 = vector.broadcast %44 : vector<1x16x32xf32> to vector<2x16x32xf32>
    %46 = arith.addf %42, %45 : vector<2x16x32xf32>
    %47 = vector.shape_cast %46 : vector<2x16x32xf32> to vector<32x32xf32>
    %c0_23 = arith.constant 0 : index
    %c0_24 = arith.constant 0 : index
    %48 = vector.load %arg8[%c0_23, %c0_24] : memref<32x16xf32, #tpu.memory_space<vmem>>, vector<32x16xf32>
    %cst_25 = arith.constant dense<0.000000e+00> : vector<32x16xf32>
    %49 = tpu.matmul %47, %48, %cst_25 {dimension_numbers = #tpu.dot_dimension_numbers<[1], [0], [0], [1], [0, 0, 1, 1], [], []>} : vector<32x32xf32>, vector<32x16xf32>, vector<32x16xf32> -> vector<32x16xf32>
    %c0_26 = arith.constant 0 : index
    %c0_27 = arith.constant 0 : index
    %50 = vector.load %arg9[%c0_26, %c0_27] : memref<1x16xf32, #tpu.memory_space<vmem>>, vector<1x16xf32>
    %51 = vector.broadcast %50 : vector<1x16xf32> to vector<32x16xf32>
    %52 = arith.addf %49, %51 : vector<32x16xf32>
    %cst_28 = arith.constant 0.000000e+00 : f32
    %53 = vector.broadcast %cst_28 : f32 to vector<32x16xf32>
    %54 = arith.maximumf %52, %53 : vector<32x16xf32>
    %55 = vector.shape_cast %54 : vector<32x16xf32> to vector<2x16x16xf32>
    %c0_29 = arith.constant 0 : index
    %c0_30 = arith.constant 0 : index
    %56 = vector.load %arg10[%c0_29, %c0_30] : memref<16x16xf32, #tpu.memory_space<vmem>>, vector<16x16xf32>
    %57 = vector.shape_cast %56 : vector<16x16xf32> to vector<1x16x16xf32>
    %58 = vector.broadcast %57 : vector<1x16x16xf32> to vector<2x16x16xf32>
    %59 = arith.mulf %55, %58 : vector<2x16x16xf32>
    %cst_31 = arith.constant dense<0.000000e+00> : vector<2x16xf32>
    %60 = vector.multi_reduction <add>, %59, %cst_31 [2] : vector<2x16x16xf32> to vector<2x16xf32>
    %61 = vector.shape_cast %60 : vector<2x16xf32> to vector<2x16x1xf32>
    %cst_32 = arith.constant dense<0.000000e+00> : vector<2x1xf32>
    %62 = vector.multi_reduction <add>, %61, %cst_32 [1] : vector<2x16x1xf32> to vector<2x1xf32>
    %63 = vector.shape_cast %62 : vector<2x1xf32> to vector<2x1x1xf32>
    %c0_33 = arith.constant 0 : index
    %c0_34 = arith.constant 0 : index
    %64 = vector.load %arg11[%c0_33, %c0_34] : memref<1x1xf32, #tpu.memory_space<vmem>>, vector<1x1xf32>
    %65 = vector.shape_cast %64 : vector<1x1xf32> to vector<1x1x1xf32>
    %66 = vector.broadcast %65 : vector<1x1x1xf32> to vector<2x1x1xf32>
    %67 = arith.addf %63, %66 : vector<2x1x1xf32>
    %68 = arith.negf %67 : vector<2x1x1xf32>
    %69 = math.exp %68 : vector<2x1x1xf32>
    %cst_35 = arith.constant 1.000000e+00 : f32
    %70 = vector.broadcast %cst_35 : f32 to vector<2x1x1xf32>
    %71 = arith.addf %70, %69 : vector<2x1x1xf32>
    %72 = arith.divf %70, %71 : vector<2x1x1xf32>
    %c0_36 = arith.constant 0 : index
    %c0_37 = arith.constant 0 : index
    %c0_38 = arith.constant 0 : index
    %73 = vector.load %arg12[%c0_36, %c0_37, %c0_38] : memref<2x1x1xf32, #tpu.memory_space<vmem>>, vector<2x1x1xf32>
    tpu.vector_store %arg12[%c0_36, %c0_37, %c0_38], %72 {strides = array<i32>} : memref<2x1x1xf32, #tpu.memory_space<vmem>>, vector<2x1x1xf32>,
    return
  }
  func.func @transform_0(%arg0: i32) -> (i32, i32, i32) {
    %c0_i32 = arith.constant 0 : i32
    %c0_i32_0 = arith.constant 0 : i32
    %c0_i32_1 = arith.constant 0 : i32
    return %arg0, %c0_i32, %c0_i32_0 : i32, i32, i32
  }
  func.func @transform_1(%arg0: i32) -> (i32, i32) {
    %c0_i32 = arith.constant 0 : i32
    %c0_i32_0 = arith.constant 0 : i32
    %c0_i32_1 = arith.constant 0 : i32
    return %c0_i32, %c0_i32_0 : i32, i32
  }
  func.func @transform_2(%arg0: i32) -> (i32, i32) {
    %c0_i32 = arith.constant 0 : i32
    %c0_i32_0 = arith.constant 0 : i32
    %c0_i32_1 = arith.constant 0 : i32
    return %c0_i32, %c0_i32_0 : i32, i32
  }
  func.func @transform_3(%arg0: i32) -> (i32, i32) {
    %c0_i32 = arith.constant 0 : i32
    %c0_i32_0 = arith.constant 0 : i32
    %c0_i32_1 = arith.constant 0 : i32
    return %c0_i32, %c0_i32_0 : i32, i32
  }
  func.func @transform_4(%arg0: i32) -> (i32, i32) {
    %c0_i32 = arith.constant 0 : i32
    %c0_i32_0 = arith.constant 0 : i32
    %c0_i32_1 = arith.constant 0 : i32
    return %c0_i32, %c0_i32_0 : i32, i32
  }
  func.func @transform_5(%arg0: i32) -> (i32, i32) {
    %c0_i32 = arith.constant 0 : i32
    %c0_i32_0 = arith.constant 0 : i32
    %c0_i32_1 = arith.constant 0 : i32
    return %c0_i32, %c0_i32_0 : i32, i32
  }
  func.func @transform_6(%arg0: i32) -> (i32, i32) {
    %c0_i32 = arith.constant 0 : i32
    %c0_i32_0 = arith.constant 0 : i32
    %c0_i32_1 = arith.constant 0 : i32
    return %c0_i32, %c0_i32_0 : i32, i32
  }
  func.func @transform_7(%arg0: i32) -> (i32, i32) {
    %c0_i32 = arith.constant 0 : i32
    %c0_i32_0 = arith.constant 0 : i32
    %c0_i32_1 = arith.constant 0 : i32
    return %c0_i32, %c0_i32_0 : i32, i32
  }
  func.func @transform_8(%arg0: i32) -> (i32, i32) {
    %c0_i32 = arith.constant 0 : i32
    %c0_i32_0 = arith.constant 0 : i32
    %c0_i32_1 = arith.constant 0 : i32
    return %c0_i32, %c0_i32_0 : i32, i32
  }
  func.func @transform_9(%arg0: i32) -> (i32, i32) {
    %c0_i32 = arith.constant 0 : i32
    %c0_i32_0 = arith.constant 0 : i32
    %c0_i32_1 = arith.constant 0 : i32
    return %c0_i32, %c0_i32_0 : i32, i32
  }
  func.func @transform_10(%arg0: i32) -> (i32, i32) {
    %c0_i32 = arith.constant 0 : i32
    %c0_i32_0 = arith.constant 0 : i32
    %c0_i32_1 = arith.constant 0 : i32
    return %c0_i32, %c0_i32_0 : i32, i32
  }
  func.func @transform_11(%arg0: i32) -> (i32, i32, i32) {
    %c0_i32 = arith.constant 0 : i32
    %c0_i32_0 = arith.constant 0 : i32
    %c0_i32_1 = arith.constant 0 : i32
    return %arg0, %c0_i32, %c0_i32_0 : i32, i32, i32
  }
}

</mosaic_0001>

<llo_original>
// kernel: tpu_custom_call.1
$region0: #{tpu_custom_call.1}
  #allocation0 [shape = 'u32[]', space=smem, size = 0x4, offset = 0x4, fixed_abs, tag = 'smem constant byte address 0x4 - core index']
  #allocation1 [shape = 'u32[144,128]{1,0:T(1,128)}', space=vmem, size = 0x12000, scoped, tag = 'internal scratch']
  #allocation2 [shape = 'f32[1,1]{1,0:T(1,128)S(1)}', space=vmem, size = 0x200, scoped, tag = 'scoped memory for tpu_custom_call.1']
  %s0 = inlined_call_operand.vmem [shape: f32[1,32,32], index: 0, kind: input, shape index: {}]
  %s1 = inlined_call_operand.hbm [shape: f32[32,32], index: 1, kind: input, shape index: {}]
  %s2 = inlined_call_operand.hbm [shape: f32[1,32], index: 2, kind: input, shape index: {}]
  %s3 = inlined_call_operand.hbm [shape: f32[32,32], index: 3, kind: input, shape index: {}]
  %s4 = inlined_call_operand.hbm [shape: f32[1,32], index: 4, kind: input, shape index: {}]
  %s5 = inlined_call_operand.vmem [shape: f32[16,32], index: 5, kind: input, shape index: {}]
  %s6 = inlined_call_operand.hbm [shape: f32[16,32], index: 6, kind: input, shape index: {}]
  %s7 = inlined_call_operand.vmem [shape: f32[32,16], index: 7, kind: input, shape index: {}]
  %s8 = inlined_call_operand.hbm [shape: f32[1,16], index: 8, kind: input, shape index: {}]
  %s9 = inlined_call_operand.vmem [shape: f32[16,16], index: 9, kind: input, shape index: {}]
  %s10 = inlined_call_operand.<no memory space> [shape: f32[1,1], index: 10, kind: input, shape index: {}]
  %s11 = inlined_call_operand.vmem [shape: f32[2,1,1], index: 11, kind: output, shape index: {}]
  %s12 = sld [smem:[#allocation0]]
  $region78: #{tpu_custom_call.1} parent=0
    _
  %s14 = ssub.s32 1, %s12
  %s15 = scalar_select 0, %s14, %s12
  %v16 = vstv %s10
  %17 = vst [vmem:[#allocation2] sm:$0x1] %v16
  $region1: #{tpu_custom_call.1} parent=0
    #allocation3 [shape = 'u8[16384]{0}', space=vmem, size = 0x4000, scoped, tag = 'input window, operand 1, single buffered']
    #allocation4 [shape = 's32[1]{0}', space=sflag, size = 0x4, scoped, tag = 'scoped memory for tpu_custom_call.1']
    #allocation5 [shape = 'u8[512]{0}', space=vmem, size = 0x400, scoped, tag = 'input window, operand 2, single buffered']
    #allocation6 [shape = 's32[1]{0}', space=sflag, size = 0x4, scoped, tag = 'scoped memory for tpu_custom_call.1']
    #allocation7 [shape = 'u8[16384]{0}', space=vmem, size = 0x4000, scoped, tag = 'input window, operand 3, single buffered']
    #allocation8 [shape = 'u8[512]{0}', space=vmem, size = 0x400, scoped, tag = 'input window, operand 4, single buffered']
    #allocation9 [shape = 's32[1]{0}', space=sflag, size = 0x4, scoped, tag = 'scoped memory for tpu_custom_call.1']
    #allocation10 [shape = 'u8[8192]{0}', space=vmem, size = 0x2000, scoped, tag = 'input window, operand 6, single buffered']
    #allocation11 [shape = 'u8[512]{0}', space=vmem, size = 0x400, scoped, tag = 'input window, operand 8, single buffered']
    #allocation12 [shape = 's32[1]{0}', space=sflag, size = 0x4, scoped, tag = 'scoped memory for tpu_custom_call.1']
    %18 = vsyncpa [#allocation4], 0
    %19 = vsyncpa [#allocation6], 0
    %20 = vsyncpa [#allocation9], 0
    %21 = vsyncpa [#allocation12], 0
    // Predicated region
    $region2: #{tpu_custom_call.1} parent=1 // pred_check
      _
    $region3: #{tpu_custom_call.1} parent=1 // pred_check_branch
      %23 = sbr.rel (0) target = $region5
    $region4: #{tpu_custom_call.1} parent=1 // pred_region
      _
    $region5: #{tpu_custom_call.1} parent=1 // pred_fallthru
      _
    // Predicated region
    $region6: #{tpu_custom_call.1} parent=1 // pred_check
      _
    $region7: #{tpu_custom_call.1} parent=1 // pred_check_branch
      %25 = sbr.rel (0) target = $region9
    $region8: #{tpu_custom_call.1} parent=1 // pred_region
      %s27 = ssub.s32 512, 512
      %28 = vsyncadd [#allocation4], %s27
      %s29 = sshll.u32 [#allocation3], 4
      %s30 = int_to_ptr.vmem [resolvable:$true] %s29
      %35 = dma.hbm_to_vmem [thread:$0]  %s1, 512, %s30, [#allocation4], 128, 128, 8
    $region9: #{tpu_custom_call.1} parent=1 // pred_fallthru
      _
    // Predicated region
    $region10: #{tpu_custom_call.1} parent=1 // pred_check
      _
    $region11: #{tpu_custom_call.1} parent=1 // pred_check_branch
      %37 = sbr.rel (0) target = $region13
    $region12: #{tpu_custom_call.1} parent=1 // pred_region
      %s39 = ssub.s32 16, 16
      %40 = vsyncadd [#allocation6], %s39
      %s42 = sshll.u32 [#allocation5], 4
      %s43 = int_to_ptr.vmem [resolvable:$true] %s42
      %45 = dma.hbm_to_vmem [thread:$0]  %s2, 16, %s43, [#allocation6]
    $region13: #{tpu_custom_call.1} parent=1 // pred_fallthru
      _
    // Predicated region
    $region14: #{tpu_custom_call.1} parent=1 // pred_check
      _
    $region15: #{tpu_custom_call.1} parent=1 // pred_check_branch
      %47 = sbr.rel (0) target = $region17
    $region16: #{tpu_custom_call.1} parent=1 // pred_region
      %s49 = ssub.s32 512, 512
      %50 = vsyncadd [#allocation6], %s49
      %s51 = sshll.u32 [#allocation7], 4
      %s52 = int_to_ptr.vmem [resolvable:$true] %s51
      %57 = dma.hbm_to_vmem [thread:$0]  %s3, 512, %s52, [#allocation6], 128, 128, 8
    $region17: #{tpu_custom_call.1} parent=1 // pred_fallthru
      _
    // Predicated region
    $region18: #{tpu_custom_call.1} parent=1 // pred_check
      _
    $region19: #{tpu_custom_call.1} parent=1 // pred_check_branch
      %59 = sbr.rel (0) target = $region21
    $region20: #{tpu_custom_call.1} parent=1 // pred_region
      %s61 = ssub.s32 16, 16
      %62 = vsyncadd [#allocation9], %s61
      %s64 = sshll.u32 [#allocation8], 4
      %s65 = int_to_ptr.vmem [resolvable:$true] %s64
      %67 = dma.hbm_to_vmem [thread:$0]  %s4, 16, %s65, [#allocation9]
    $region21: #{tpu_custom_call.1} parent=1 // pred_fallthru
      _
    // Predicated region
    $region22: #{tpu_custom_call.1} parent=1 // pred_check
      _
    $region23: #{tpu_custom_call.1} parent=1 // pred_check_branch
      %69 = sbr.rel (0) target = $region25
    $region24: #{tpu_custom_call.1} parent=1 // pred_region
      _
    $region25: #{tpu_custom_call.1} parent=1 // pred_fallthru
      _
    // Predicated region
    $region26: #{tpu_custom_call.1} parent=1 // pred_check
      _
    $region27: #{tpu_custom_call.1} parent=1 // pred_check_branch
      %71 = sbr.rel (0) target = $region29
    $region28: #{tpu_custom_call.1} parent=1 // pred_region
      %s73 = ssub.s32 256, 256
      %74 = vsyncadd [#allocation9], %s73
      %s75 = sshll.u32 [#allocation10], 4
      %s76 = int_to_ptr.vmem [resolvable:$true] %s75
      %81 = dma.hbm_to_vmem [thread:$0]  %s6, 256, %s76, [#allocation9], 128, 128, 8
    $region29: #{tpu_custom_call.1} parent=1 // pred_fallthru
      _
    // Predicated region
    $region30: #{tpu_custom_call.1} parent=1 // pred_check
      _
    $region31: #{tpu_custom_call.1} parent=1 // pred_check_branch
      %83 = sbr.rel (0) target = $region33
    $region32: #{tpu_custom_call.1} parent=1 // pred_region
      _
    $region33: #{tpu_custom_call.1} parent=1 // pred_fallthru
      _
    // Predicated region
    $region34: #{tpu_custom_call.1} parent=1 // pred_check
      _
    $region35: #{tpu_custom_call.1} parent=1 // pred_check_branch
      %85 = sbr.rel (0) target = $region37
    $region36: #{tpu_custom_call.1} parent=1 // pred_region
      %s87 = ssub.s32 16, 16
      %88 = vsyncadd [#allocation12], %s87
      %s90 = sshll.u32 [#allocation11], 4
      %s91 = int_to_ptr.vmem [resolvable:$true] %s90
      %93 = dma.hbm_to_vmem [thread:$0]  %s8, 16, %s91, [#allocation12]
    $region37: #{tpu_custom_call.1} parent=1 // pred_fallthru
      _
    // Predicated region
    $region38: #{tpu_custom_call.1} parent=1 // pred_check
      _
    $region39: #{tpu_custom_call.1} parent=1 // pred_check_branch
      %95 = sbr.rel (0) target = $region41
    $region40: #{tpu_custom_call.1} parent=1 // pred_region
      _
    $region41: #{tpu_custom_call.1} parent=1 // pred_fallthru
      _
    // Predicated region
    $region42: #{tpu_custom_call.1} parent=1 // pred_check
      _
    $region43: #{tpu_custom_call.1} parent=1 // pred_check_branch
      %97 = sbr.rel (0) target = $region45
    $region44: #{tpu_custom_call.1} parent=1 // pred_region
      _
    $region45: #{tpu_custom_call.1} parent=1 // pred_fallthru
      _
    // Predicated region
    $region46: #{tpu_custom_call.1} parent=1 // pred_check
      _
    $region47: #{tpu_custom_call.1} parent=1 // pred_check_branch
      %99 = sbr.rel (0) target = $region49
    $region48: #{tpu_custom_call.1} parent=1 // pred_region
      %100 = dma.done [#allocation4], 512
    $region49: #{tpu_custom_call.1} parent=1 // pred_fallthru
      _
    // Predicated region
    $region50: #{tpu_custom_call.1} parent=1 // pred_check
      _
    $region51: #{tpu_custom_call.1} parent=1 // pred_check_branch
      %102 = sbr.rel (0) target = $region53
    $region52: #{tpu_custom_call.1} parent=1 // pred_region
      %103 = dma.done [#allocation6], 16
    $region53: #{tpu_custom_call.1} parent=1 // pred_fallthru
      _
    // Predicated region
    $region54: #{tpu_custom_call.1} parent=1 // pred_check
      _
    $region55: #{tpu_custom_call.1} parent=1 // pred_check_branch
      %105 = sbr.rel (0) target = $region57
    $region56: #{tpu_custom_call.1} parent=1 // pred_region
      %106 = dma.done [#allocation6], 512
    $region57: #{tpu_custom_call.1} parent=1 // pred_fallthru
      _
    // Predicated region
    $region58: #{tpu_custom_call.1} parent=1 // pred_check
      _
    $region59: #{tpu_custom_call.1} parent=1 // pred_check_branch
      %108 = sbr.rel (0) target = $region61
    $region60: #{tpu_custom_call.1} parent=1 // pred_region
      %109 = dma.done [#allocation9], 16
    $region61: #{tpu_custom_call.1} parent=1 // pred_fallthru
      _
    // Predicated region
    $region62: #{tpu_custom_call.1} parent=1 // pred_check
      _
    $region63: #{tpu_custom_call.1} parent=1 // pred_check_branch
      %111 = sbr.rel (0) target = $region65
    $region64: #{tpu_custom_call.1} parent=1 // pred_region
      %112 = dma.done [#allocation9], 256
    $region65: #{tpu_custom_call.1} parent=1 // pred_fallthru
      _
    // Predicated region
    $region66: #{tpu_custom_call.1} parent=1 // pred_check
      _
    $region67: #{tpu_custom_call.1} parent=1 // pred_check_branch
      %114 = sbr.rel (0) target = $region69
    $region68: #{tpu_custom_call.1} parent=1 // pred_region
      %115 = dma.done [#allocation12], 16
    $region69: #{tpu_custom_call.1} parent=1 // pred_fallthru
      _
    %v116 = vld [vmem:[%s0] sm:$0xff]
    %v117 = vld [vmem:[%s0 + $0x8] sm:$0xff]
    %v118 = vld [vmem:[%s0 + $0x10] sm:$0xff]
    %v119 = vld [vmem:[%s0 + $0x18] sm:$0xff]
    %v120 = vld [vmem:[#allocation3] sm:$0xff]
    %v121 = vld [vmem:[#allocation3 + $0x8] sm:$0xff]
    %v122 = vld [vmem:[#allocation3 + $0x10] sm:$0xff]
    %v123 = vld [vmem:[#allocation3 + $0x18] sm:$0xff]
    %v124 = vld [vmem:[#allocation5] sm:$0x1]
    %v126 = vlaneseq
    %v127 = vshrl.u32 %v126, 7
    %v128 = vsub.s32 0, %v127
    %v129 = vrot.slane %v124, %v128
    %vm131 = vcmask 261120
    %v133 = vsel %vm131, %v116, 0
    %v136 = vsel %vm131, %v117, 0
    %v139 = vsel %vm131, %v118, 0
    %v142 = vsel %vm131, %v119, 0
    %144 = vmatprep.subr.mxu0 0.0
    %145 = vmatpush1.msra.mxu0 0.0
    %146 = vmatprep.subr.mxu0 0.0
    %147 = vmatpush1.msra.mxu0 0.0
    %148 = vmatprep.subr.mxu0 0.0
    %149 = vmatpush1.msra.mxu0 0.0
    %150 = vmatprep.subr.mxu0 0.0
    %151 = vmatpush1.msra.mxu0 0.0
    %152 = vmatprep.subr.mxu0 0.0
    %153 = vmatpush1.msra.mxu0 0.0
    %154 = vmatprep.subr.mxu0 0.0
    %155 = vmatpush1.msra.mxu0 0.0
    %156 = vmatprep.subr.mxu0 0.0
    %157 = vmatpush1.msra.mxu0 0.0
    %158 = vmatprep.subr.mxu0 0.0
    %159 = vmatpush1.msra.mxu0 0.0
    %160 = vmatprep.subr.mxu0 0.0
    %161 = vmatpush1.msra.mxu0 0.0
    %162 = vmatprep.subr.mxu0 0.0
    %163 = vmatpush1.msra.mxu0 0.0
    %164 = vmatprep.subr.mxu0 0.0
    %165 = vmatpush1.msra.mxu0 0.0
    %166 = vmatprep.subr.mxu0 0.0
    %167 = vmatpush1.msra.mxu0 0.0
    %168 = vmatprep.subr.mxu0 0.0
    %169 = vmatpush1.msra.mxu0 %v123
    %170 = vmatprep.subr.mxu0 0.0
    %171 = vmatpush1.msra.mxu0 %v122
    %172 = vmatprep.subr.mxu0 0.0
    %173 = vmatpush1.msra.mxu0 %v121
    %174 = vmatprep.subr.mxu0 0.0
    %175 = vmatpush1.msra.mxu0 %v120
    %176 = vmatprep.subr.mxu0 0.0
    %177 = vmatpush2.msra.mxu0 0.0
    %178 = vmatprep.subr.mxu0 0.0
    %179 = vmatpush2.msra.mxu0 0.0
    %180 = vmatprep.subr.mxu0 0.0
    %181 = vmatpush2.msra.mxu0 0.0
    %182 = vmatprep.subr.mxu0 0.0
    %183 = vmatpush2.msra.mxu0 0.0
    %184 = vmatprep.subr.mxu0 0.0
    %185 = vmatpush2.msra.mxu0 0.0
    %186 = vmatprep.subr.mxu0 0.0
    %187 = vmatpush2.msra.mxu0 0.0
    %188 = vmatprep.subr.mxu0 0.0
    %189 = vmatpush2.msra.mxu0 0.0
    %190 = vmatprep.subr.mxu0 0.0
    %191 = vmatpush2.msra.mxu0 0.0
    %192 = vmatprep.subr.mxu0 0.0
    %193 = vmatpush2.msra.mxu0 0.0
    %194 = vmatprep.subr.mxu0 0.0
    %195 = vmatpush2.msra.mxu0 0.0
    %196 = vmatprep.subr.mxu0 0.0
    %197 = vmatpush2.msra.mxu0 0.0
    %198 = vmatprep.subr.mxu0 0.0
    %199 = vmatpush2.msra.mxu0 0.0
    %200 = vmatprep.subr.mxu0 0.0
    %201 = vmatpush2.msra.mxu0 0.0
    %202 = vmatprep.subr.mxu0 0.0
    %203 = vmatpush2.msra.mxu0 0.0
    %204 = vmatprep.subr.mxu0 0.0
    %205 = vmatpush2.msra.mxu0 0.0
    %206 = vmatprep.subr.mxu0 0.0
    %207 = vmatpush2.msra.mxu0 0.0
    %208 = vmatprep.mubr.f32.mxu0 0.0
    %209 = vmatmul.mubr.f32.gmra.mxu0 %v133
    %v210 = vpop.f32.mrf.mxu0
    %v211 = vadd.f32 %v129, %v210
    %v212 = vpop.f32.mrf.mxu0
    %213 = vmatprep.mubr.f32.mxu0 0.0
    %214 = vmatmul.mubr.f32.gmra.mxu0 %v136
    %v215 = vpop.f32.mrf.mxu0
    %v216 = vadd.f32 %v129, %v215
    %v217 = vpop.f32.mrf.mxu0
    %218 = vmatprep.mubr.f32.mxu0 0.0
    %219 = vmatmul.mubr.f32.gmra.mxu0 %v139
    %v220 = vpop.f32.mrf.mxu0
    %v221 = vadd.f32 %v129, %v220
    %v222 = vpop.f32.mrf.mxu0
    %223 = vmatprep.mubr.f32.mxu0 0.0
    %224 = vmatmul.mubr.f32.gmra.mxu0 %v142
    %v225 = vpop.f32.mrf.mxu0
    %v226 = vadd.f32 %v129, %v225
    %v227 = vpop.f32.mrf.mxu0
    %228 = vdwg.mxu0
    %v229 = vld [vmem:[#allocation7] sm:$0xff]
    %v230 = vld [vmem:[#allocation7 + $0x8] sm:$0xff]
    %v231 = vld [vmem:[#allocation7 + $0x10] sm:$0xff]
    %v232 = vld [vmem:[#allocation7 + $0x18] sm:$0xff]
    %v233 = vld [vmem:[#allocation8] sm:$0x1]
    %v235 = vlaneseq
    %v236 = vshrl.u32 %v235, 7
    %v237 = vsub.s32 0, %v236
    %v238 = vrot.slane %v233, %v237
    %240 = vmatprep.subr.mxu0 0.0
    %241 = vmatpush1.msra.mxu0 0.0
    %242 = vmatprep.subr.mxu0 0.0
    %243 = vmatpush1.msra.mxu0 0.0
    %244 = vmatprep.subr.mxu0 0.0
    %245 = vmatpush1.msra.mxu0 0.0
    %246 = vmatprep.subr.mxu0 0.0
    %247 = vmatpush1.msra.mxu0 0.0
    %248 = vmatprep.subr.mxu0 0.0
    %249 = vmatpush1.msra.mxu0 0.0
    %250 = vmatprep.subr.mxu0 0.0
    %251 = vmatpush1.msra.mxu0 0.0
    %252 = vmatprep.subr.mxu0 0.0
    %253 = vmatpush1.msra.mxu0 0.0
    %254 = vmatprep.subr.mxu0 0.0
    %255 = vmatpush1.msra.mxu0 0.0
    %256 = vmatprep.subr.mxu0 0.0
    %257 = vmatpush1.msra.mxu0 0.0
    %258 = vmatprep.subr.mxu0 0.0
    %259 = vmatpush1.msra.mxu0 0.0
    %260 = vmatprep.subr.mxu0 0.0
    %261 = vmatpush1.msra.mxu0 0.0
    %262 = vmatprep.subr.mxu0 0.0
    %263 = vmatpush1.msra.mxu0 0.0
    %264 = vmatprep.subr.mxu0 0.0
    %265 = vmatpush1.msra.mxu0 %v232
    %266 = vmatprep.subr.mxu0 0.0
    %267 = vmatpush1.msra.mxu0 %v231
    %268 = vmatprep.subr.mxu0 0.0
    %269 = vmatpush1.msra.mxu0 %v230
    %270 = vmatprep.subr.mxu0 0.0
    %271 = vmatpush1.msra.mxu0 %v229
    %272 = vmatprep.subr.mxu0 0.0
    %273 = vmatpush2.msra.mxu0 0.0
    %274 = vmatprep.subr.mxu0 0.0
    %275 = vmatpush2.msra.mxu0 0.0
    %276 = vmatprep.subr.mxu0 0.0
    %277 = vmatpush2.msra.mxu0 0.0
    %278 = vmatprep.subr.mxu0 0.0
    %279 = vmatpush2.msra.mxu0 0.0
    %280 = vmatprep.subr.mxu0 0.0
    %281 = vmatpush2.msra.mxu0 0.0
    %282 = vmatprep.subr.mxu0 0.0
    %283 = vmatpush2.msra.mxu0 0.0
    %284 = vmatprep.subr.mxu0 0.0
    %285 = vmatpush2.msra.mxu0 0.0
    %286 = vmatprep.subr.mxu0 0.0
    %287 = vmatpush2.msra.mxu0 0.0
    %288 = vmatprep.subr.mxu0 0.0
    %289 = vmatpush2.msra.mxu0 0.0
    %290 = vmatprep.subr.mxu0 0.0
    %291 = vmatpush2.msra.mxu0 0.0
    %292 = vmatprep.subr.mxu0 0.0
    %293 = vmatpush2.msra.mxu0 0.0
    %294 = vmatprep.subr.mxu0 0.0
    %295 = vmatpush2.msra.mxu0 0.0
    %296 = vmatprep.subr.mxu0 0.0
    %297 = vmatpush2.msra.mxu0 0.0
    %298 = vmatprep.subr.mxu0 0.0
    %299 = vmatpush2.msra.mxu0 0.0
    %300 = vmatprep.subr.mxu0 0.0
    %301 = vmatpush2.msra.mxu0 0.0
    %302 = vmatprep.subr.mxu0 0.0
    %303 = vmatpush2.msra.mxu0 0.0
    %304 = vmatprep.mubr.f32.mxu0 0.0
    %305 = vmatmul.mubr.f32.gmra.mxu0 %v133
    %v306 = vpop.f32.mrf.mxu0
    %v307 = vadd.f32 %v238, %v306
    %v308 = vpop.f32.mrf.mxu0
    %309 = vmatprep.mubr.f32.mxu0 0.0
    %310 = vmatmul.mubr.f32.gmra.mxu0 %v136
    %v311 = vpop.f32.mrf.mxu0
    %v312 = vadd.f32 %v238, %v311
    %v313 = vpop.f32.mrf.mxu0
    %314 = vmatprep.mubr.f32.mxu0 0.0
    %315 = vmatmul.mubr.f32.gmra.mxu0 %v139
    %v316 = vpop.f32.mrf.mxu0
    %v317 = vadd.f32 %v238, %v316
    %v318 = vpop.f32.mrf.mxu0
    %319 = vmatprep.mubr.f32.mxu0 0.0
    %320 = vmatmul.mubr.f32.gmra.mxu0 %v142
    %v321 = vpop.f32.mrf.mxu0
    %v322 = vadd.f32 %v238, %v321
    %v323 = vpop.f32.mrf.mxu0
    %324 = vdwg.mxu0
    %v325 = vxor.u32 %v307, 2147483648
    %v326 = vxor.u32 %v312, 2147483648
    %v327 = vxor.u32 %v317, 2147483648
    %v328 = vxor.u32 %v322, 2147483648
    %v329 = vmul.f32 %v325, 1.442695
    %v330 = vpow.pop %v329
    %v331 = vmul.f32 %v326, 1.442695
    %v332 = vpow.pop %v331
    %v333 = vmul.f32 %v327, 1.442695
    %v334 = vpow.pop %v333
    %v335 = vmul.f32 %v328, 1.442695
    %v336 = vpow.pop %v335
    %v337 = vadd.f32 %v330, 1.0
    %v338 = vadd.f32 %v332, 1.0
    %v339 = vadd.f32 %v334, 1.0
    %v340 = vadd.f32 %v336, 1.0
    %v341 = vrcp.pop %v337
    %v342 = vmul.f32 1.0, %v341
    %v343 = vrcp.pop %v338
    %v344 = vmul.f32 1.0, %v343
    %v345 = vrcp.pop %v339
    %v346 = vmul.f32 1.0, %v345
    %v347 = vrcp.pop %v340
    %v348 = vmul.f32 1.0, %v347
    %v349 = vmul.f32 %v211, %v342
    %v350 = vmul.f32 %v216, %v344
    %v351 = vmul.f32 %v221, %v346
    %v352 = vmul.f32 %v226, %v348
    %v353 = vsel %vm131, %v349, 0.0
    %354 = vadd.xlane.f32.xlu0 %v353
    %v355 = vpop.xlane.xlu0 %354
    %v356 = vsel %vm131, %v350, 0.0
    %357 = vadd.xlane.f32.xlu0 %v356
    %v358 = vpop.xlane.xlu0 %357
    %v359 = vsel %vm131, %v351, 0.0
    %360 = vadd.xlane.f32.xlu0 %v359
    %v361 = vpop.xlane.xlu0 %360
    %v362 = vsel %vm131, %v352, 0.0
    %363 = vadd.xlane.f32.xlu0 %v362
    %v364 = vpop.xlane.xlu0 %363
    %v365 = vadd.f32 %v355, %v358
    %v366 = vrot.slane %v365, 4
    %v367 = vadd.f32 %v365, %v366
    %v368 = vrot.slane %v367, 2
    %v369 = vadd.f32 %v367, %v368
    %v370 = vrot.slane %v369, 1
    %v371 = vadd.f32 %v369, %v370
    %v372 = vadd.f32 %v361, %v364
    %v373 = vrot.slane %v372, 4
    %v374 = vadd.f32 %v372, %v373
    %v375 = vrot.slane %v374, 2
    %v376 = vadd.f32 %v374, %v375
    %v377 = vrot.slane %v376, 1
    %v378 = vadd.f32 %v376, %v377
    %v379 = vmul.f32 %v371, 0.001953125
    %v380 = vmul.f32 %v378, 0.001953125
    %v381 = vsub.f32 %v349, %v379
    %v382 = vsub.f32 %v350, %v379
    %v383 = vsub.f32 %v351, %v380
    %v384 = vsub.f32 %v352, %v380
    %v385 = vmul.f32 %v381, %v381
    %v386 = vmul.f32 %v382, %v382
    %v387 = vmul.f32 %v383, %v383
    %v388 = vmul.f32 %v384, %v384
    %v389 = vsel %vm131, %v385, 0.0
    %390 = vadd.xlane.f32.xlu0 %v389
    %v391 = vpop.xlane.xlu0 %390
    %v392 = vsel %vm131, %v386, 0.0
    %393 = vadd.xlane.f32.xlu0 %v392
    %v394 = vpop.xlane.xlu0 %393
    %v395 = vsel %vm131, %v387, 0.0
    %396 = vadd.xlane.f32.xlu0 %v395
    %v397 = vpop.xlane.xlu0 %396
    %v398 = vsel %vm131, %v388, 0.0
    %399 = vadd.xlane.f32.xlu0 %v398
    %v400 = vpop.xlane.xlu0 %399
    %v401 = vadd.f32 %v391, %v394
    %v402 = vrot.slane %v401, 4
    %v403 = vadd.f32 %v401, %v402
    %v404 = vrot.slane %v403, 2
    %v405 = vadd.f32 %v403, %v404
    %v406 = vrot.slane %v405, 1
    %v407 = vadd.f32 %v405, %v406
    %v408 = vadd.f32 %v397, %v400
    %v409 = vrot.slane %v408, 4
    %v410 = vadd.f32 %v408, %v409
    %v411 = vrot.slane %v410, 2
    %v412 = vadd.f32 %v410, %v411
    %v413 = vrot.slane %v412, 1
    %v414 = vadd.f32 %v412, %v413
    %v415 = vmul.f32 %v407, 0.001953125
    %v416 = vmul.f32 %v414, 0.001953125
    %v417 = vadd.f32 %v415, 1e-05
    %v418 = vadd.f32 %v416, 1e-05
    %v419 = vrsqrt.pop %v417
    %v420 = vrsqrt.pop %v418
    %v421 = vmul.f32 %v381, %v419
    %v422 = vmul.f32 %v382, %v419
    %v423 = vmul.f32 %v383, %v420
    %v424 = vmul.f32 %v384, %v420
    %v425 = vld [vmem:[%s5] sm:$0xff]
    %v426 = vld [vmem:[%s5 + $0x8] sm:$0xff]
    %v427 = vmul.f32 %v421, %v425
    %v428 = vmul.f32 %v422, %v426
    %v429 = vmul.f32 %v423, %v425
    %v430 = vmul.f32 %v424, %v426
    %v431 = vld [vmem:[#allocation10] sm:$0xff]
    %v432 = vld [vmem:[#allocation10 + $0x8] sm:$0xff]
    %v433 = vadd.f32 %v427, %v431
    %v434 = vadd.f32 %v428, %v432
    %v435 = vadd.f32 %v429, %v431
    %v436 = vadd.f32 %v430, %v432
    %v437 = vld [vmem:[%s7] sm:$0xff]
    %v438 = vld [vmem:[%s7 + $0x8] sm:$0xff]
    %v439 = vld [vmem:[%s7 + $0x10] sm:$0xff]
    %v440 = vld [vmem:[%s7 + $0x18] sm:$0xff]
    %v441 = vld [vmem:[#allocation11] sm:$0x1]
    %v443 = vlaneseq
    %v444 = vshrl.u32 %v443, 7
    %v445 = vsub.s32 0, %v444
    %v446 = vrot.slane %v441, %v445
    %v449 = vsel %vm131, %v433, 0
    %v452 = vsel %vm131, %v434, 0
    %v455 = vsel %vm131, %v435, 0
    %v458 = vsel %vm131, %v436, 0
    %460 = vmatprep.subr.mxu0 0.0
    %461 = vmatpush1.msra.mxu0 0.0
    %462 = vmatprep.subr.mxu0 0.0
    %463 = vmatpush1.msra.mxu0 0.0
    %464 = vmatprep.subr.mxu0 0.0
    %465 = vmatpush1.msra.mxu0 0.0
    %466 = vmatprep.subr.mxu0 0.0
    %467 = vmatpush1.msra.mxu0 0.0
    %468 = vmatprep.subr.mxu0 0.0
    %469 = vmatpush1.msra.mxu0 0.0
    %470 = vmatprep.subr.mxu0 0.0
    %471 = vmatpush1.msra.mxu0 0.0
    %472 = vmatprep.subr.mxu0 0.0
    %473 = vmatpush1.msra.mxu0 0.0
    %474 = vmatprep.subr.mxu0 0.0
    %475 = vmatpush1.msra.mxu0 0.0
    %476 = vmatprep.subr.mxu0 0.0
    %477 = vmatpush1.msra.mxu0 0.0
    %478 = vmatprep.subr.mxu0 0.0
    %479 = vmatpush1.msra.mxu0 0.0
    %480 = vmatprep.subr.mxu0 0.0
    %481 = vmatpush1.msra.mxu0 0.0
    %482 = vmatprep.subr.mxu0 0.0
    %483 = vmatpush1.msra.mxu0 0.0
    %484 = vmatprep.subr.mxu0 0.0
    %485 = vmatpush1.msra.mxu0 %v440
    %486 = vmatprep.subr.mxu0 0.0
    %487 = vmatpush1.msra.mxu0 %v439
    %488 = vmatprep.subr.mxu0 0.0
    %489 = vmatpush1.msra.mxu0 %v438
    %490 = vmatprep.subr.mxu0 0.0
    %491 = vmatpush1.msra.mxu0 %v437
    %492 = vmatprep.subr.mxu0 0.0
    %493 = vmatpush2.msra.mxu0 0.0
    %494 = vmatprep.subr.mxu0 0.0
    %495 = vmatpush2.msra.mxu0 0.0
    %496 = vmatprep.subr.mxu0 0.0
    %497 = vmatpush2.msra.mxu0 0.0
    %498 = vmatprep.subr.mxu0 0.0
    %499 = vmatpush2.msra.mxu0 0.0
    %500 = vmatprep.subr.mxu0 0.0
    %501 = vmatpush2.msra.mxu0 0.0
    %502 = vmatprep.subr.mxu0 0.0
    %503 = vmatpush2.msra.mxu0 0.0
    %504 = vmatprep.subr.mxu0 0.0
    %505 = vmatpush2.msra.mxu0 0.0
    %506 = vmatprep.subr.mxu0 0.0
    %507 = vmatpush2.msra.mxu0 0.0
    %508 = vmatprep.subr.mxu0 0.0
    %509 = vmatpush2.msra.mxu0 0.0
    %510 = vmatprep.subr.mxu0 0.0
    %511 = vmatpush2.msra.mxu0 0.0
    %512 = vmatprep.subr.mxu0 0.0
    %513 = vmatpush2.msra.mxu0 0.0
    %514 = vmatprep.subr.mxu0 0.0
    %515 = vmatpush2.msra.mxu0 0.0
    %516 = vmatprep.subr.mxu0 0.0
    %517 = vmatpush2.msra.mxu0 0.0
    %518 = vmatprep.subr.mxu0 0.0
    %519 = vmatpush2.msra.mxu0 0.0
    %520 = vmatprep.subr.mxu0 0.0
    %521 = vmatpush2.msra.mxu0 0.0
    %522 = vmatprep.subr.mxu0 0.0
    %523 = vmatpush2.msra.mxu0 0.0
    %524 = vmatprep.mubr.f32.mxu0 0.0
    %525 = vmatmul.mubr.f32.gmra.mxu0 %v449
    %v526 = vpop.f32.mrf.mxu0
    %v527 = vadd.f32 %v446, %v526
    %v528 = vpop.f32.mrf.mxu0
    %529 = vmatprep.mubr.f32.mxu0 0.0
    %530 = vmatmul.mubr.f32.gmra.mxu0 %v452
    %v531 = vpop.f32.mrf.mxu0
    %v532 = vadd.f32 %v446, %v531
    %v533 = vpop.f32.mrf.mxu0
    %534 = vmatprep.mubr.f32.mxu0 0.0
    %535 = vmatmul.mubr.f32.gmra.mxu0 %v455
    %v536 = vpop.f32.mrf.mxu0
    %v537 = vadd.f32 %v446, %v536
    %v538 = vpop.f32.mrf.mxu0
    %539 = vmatprep.mubr.f32.mxu0 0.0
    %540 = vmatmul.mubr.f32.gmra.mxu0 %v458
    %v541 = vpop.f32.mrf.mxu0
    %v542 = vadd.f32 %v446, %v541
    %v543 = vpop.f32.mrf.mxu0
    %544 = vdwg.mxu0
    %v545 = vmax.f32 %v527, 0.0
    %v546 = vmax.f32 %v532, 0.0
    %v547 = vmax.f32 %v537, 0.0
    %v548 = vmax.f32 %v542, 0.0
    %v549 = vld [vmem:[%s9] sm:$0xff]
    %v550 = vld [vmem:[%s9 + $0x8] sm:$0xff]
    %v551 = vmul.f32 %v545, %v549
    %v552 = vmul.f32 %v546, %v550
    %v553 = vmul.f32 %v547, %v549
    %v554 = vmul.f32 %v548, %v550
    %vm555 = vcmask 130048
    %v556 = vsel %vm555, %v551, 0.0
    %557 = vadd.xlane.f32.xlu0 %v556
    %v558 = vpop.xlane.xlu0 %557
    %v559 = vsel %vm555, %v552, 0.0
    %560 = vadd.xlane.f32.xlu0 %v559
    %v561 = vpop.xlane.xlu0 %560
    %v562 = vsel %vm555, %v553, 0.0
    %563 = vadd.xlane.f32.xlu0 %v562
    %v564 = vpop.xlane.xlu0 %563
    %v565 = vsel %vm555, %v554, 0.0
    %566 = vadd.xlane.f32.xlu0 %v565
    %v567 = vpop.xlane.xlu0 %566
    %v568 = vadd.f32 %v558, %v561
    %v569 = vrot.slane %v568, 4
    %v570 = vadd.f32 %v568, %v569
    %v571 = vrot.slane %v570, 2
    %v572 = vadd.f32 %v570, %v571
    %v573 = vrot.slane %v572, 1
    %v574 = vadd.f32 %v572, %v573
    %v575 = vadd.f32 %v564, %v567
    %v576 = vrot.slane %v575, 4
    %v577 = vadd.f32 %v575, %v576
    %v578 = vrot.slane %v577, 2
    %v579 = vadd.f32 %v577, %v578
    %v580 = vrot.slane %v579, 1
    %v581 = vadd.f32 %v579, %v580
    %v582 = vld [vmem:[#allocation2] sm:$0x1]
    %v583 = vadd.f32 %v574, %v582
    %v584 = vadd.f32 %v581, %v582
    %v585 = vxor.u32 %v583, 2147483648
    %v586 = vxor.u32 %v584, 2147483648
    %v587 = vmul.f32 %v585, 1.442695
    %v588 = vpow.pop %v587
    %v589 = vmul.f32 %v586, 1.442695
    %v590 = vpow.pop %v589
    %v591 = vadd.f32 %v588, 1.0
    %v592 = vadd.f32 %v590, 1.0
    %v593 = vrcp.pop %v591
    %v594 = vmul.f32 1.0, %v593
    %v595 = vrcp.pop %v592
    %v596 = vmul.f32 1.0, %v595
    %vm597 = vcmask 0
    %598 = vst.msk [vmem:[%s11] sm:$0x1] %vm597, %v594
    %599 = vst.msk [vmem:[%s11 + $0x1] sm:$0x1] %vm597, %v596
    // Predicated region
    $region70: #{tpu_custom_call.1} parent=1 // pred_check
      _
    $region71: #{tpu_custom_call.1} parent=1 // pred_check_branch
      %601 = sbr.rel (0) target = $region73
    $region72: #{tpu_custom_call.1} parent=1 // pred_region
      _
    $region73: #{tpu_custom_call.1} parent=1 // pred_fallthru
      _
    // Predicated region
    $region74: #{tpu_custom_call.1} parent=1 // pred_check
      _
    $region75: #{tpu_custom_call.1} parent=1 // pred_check_branch
      %603 = sbr.rel (0) target = $region77
    $region76: #{tpu_custom_call.1} parent=1 // pred_region
      _
    $region77: #{tpu_custom_call.1} parent=1 // pred_fallthru
      _
    %604 = vsyncpa [#allocation4], 1
    %605 = vsyncpa [#allocation6], 1
    %606 = vsyncpa [#allocation9], 1
    %607 = vsyncpa [#allocation12], 1

</llo_original>
